<compile_context>
chip_gen: v6e
topology: v6e:2x2x1
jax: 0.10.0
libtpu: 0.0.40
codegen_flags: <defaults>
</compile_context>

<pallas_src>
import jax
import jax.numpy as jnp
from jax import lax
from jax.experimental import pallas as pl
from jax.experimental.pallas import tpu as pltpu

_BN_EPS = 1e-5


# ----------------------------------------------------------------------------
# Tiny one-off probe: pltpu.roll's rotation direction is taken from the backend
# convention; we probe it once (eagerly, before tracing the main kernel) so the
# conv-tap shifts are built with the correct sign either way.
# ----------------------------------------------------------------------------
def _roll_probe_kernel(x_ref, o_ref):
    o_ref[...] = pltpu.roll(x_ref[...], shift=1, axis=1)


def probe_roll_like_jnp():
    """True iff pltpu.roll(x, shift)[..., i] == x[..., (i - shift) % n] (jnp.roll)."""
    x = jnp.tile(jnp.arange(128, dtype=jnp.float32)[None, :], (8, 1))
    y = pl.pallas_call(
        _roll_probe_kernel,
        out_shape=jax.ShapeDtypeStruct((8, 128), jnp.float32),
    )(x)
    return bool(jax.device_get(y)[0, 1] == 0.0)


# ----------------------------------------------------------------------------
# Kernel
# ----------------------------------------------------------------------------
def _make_dense_block_kernel(c0, g, num_layers, H, W, roll_like_jnp):
    N = H * W
    cf = c0 + num_layers * g
    taps = [(ky, kx) for ky in range(3) for kx in range(3)]   # t = ky*3 + kx

    def kernel(x_ref, mask_ref, *refs):
        o_ref = refs[-1]
        layer_refs = refs[:-1]

        # Seed the DenseNet feature buffer: original input lives in the tail channels.
        o_ref[0, num_layers * g:cf, :] = x_ref[0]

        for l in range(num_layers):
            w_ref = layer_refs[3 * l]          # (9*g, c_l) bf16  (taps stacked on rows)
            scale_ref = layer_refs[3 * l + 1]  # (c_l, 1) f32, folded BN scale
            shift_ref = layer_refs[3 * l + 2]  # (c_l, 1) f32, folded BN shift
            c_l = c0 + l * g
            start = (num_layers - l) * g

            # Layer input = current feature stack [out_{l-1}, ..., out_0, x],
            # read straight back from the output block (no concat materialized).
            cur = o_ref[0, start:cf, :]                                  # (c_l, N) f32

            # BatchNorm (inference, folded) + ReLU, then bf16 for the MXU.
            z = jnp.maximum(cur * scale_ref[...] + shift_ref[...], 0.0)
            z = z.astype(jnp.bfloat16)

            # One fused matmul for all 9 taps over the shared activation.
            u = jnp.dot(w_ref[...], z,
                        preferred_element_type=jnp.float32)              # (9*g, N) f32

            # Combine taps: lane rotation by the flat-index offset of each tap
            # + validity mask (kills out-of-image neighbours and the circular wrap).
            acc = u[4 * g:5 * g, :]                      # centre tap: shift 0, mask all-ones
            for t, (ky, kx) in enumerate(taps):
                if t == 4:
                    continue
                s = (ky - 1) * W + (kx - 1)              # want shifted[p] = u_t[p + s]
                amt = ((-s) if roll_like_jnp else s) % N
                ut = pltpu.roll(u[t * g:(t + 1) * g, :], shift=amt, axis=1)
                acc = acc + ut * mask_ref[t:t + 1, :]

            # torch.cat((out, x), dim=1) prepends: write directly in front.
            o_ref[0, (num_layers - 1 - l) * g:(num_layers - l) * g, :] = acc

    return kernel


# ----------------------------------------------------------------------------
# Wrapper
# ----------------------------------------------------------------------------
def dense_block_forward(x, layer_params, *, growth_rate, roll_like_jnp=True):
    """Forward pass of dense_block.

    x: (B, C0, H, W) float32.
    layer_params: tuple of (gamma, beta, running_mean, running_var, conv_w) per
      layer, conv_w of shape (growth_rate, C0 + l*growth_rate, 3, 3).
    Returns (B, C0 + L*growth_rate, H, W) float32 with channels ordered
    [out_{L-1}, ..., out_1, out_0, x], exactly as the PyTorch module.
    """
    b, c0, H, W = x.shape
    g = growth_rate
    L = len(layer_params)
    N = H * W
    cf = c0 + L * g

    # Free reshape only (no HBM transpose): spatial goes onto the lane axis.
    x_flat = x.reshape(b, c0, N).astype(jnp.float32)

    # Per-tap validity masks, indexed by output pixel p = h*W + w.
    hh = jnp.arange(H)[:, None]
    ww = jnp.arange(W)[None, :]
    masks = []
    for ky in range(3):
        for kx in range(3):
            dy, dx = ky - 1, kx - 1
            valid = ((hh + dy >= 0) & (hh + dy < H) &
                     (ww + dx >= 0) & (ww + dx < W))
            masks.append(valid.reshape(N))
    mask9 = jnp.stack(masks, axis=0).astype(jnp.float32)                 # (9, N)

    inputs = [x_flat, mask9]
    in_specs = [
        pl.BlockSpec((1, c0, N), lambda i: (i, 0, 0)),
        pl.BlockSpec((9, N), lambda i: (0, 0)),
    ]
    flops = 0
    for l, (gamma, beta, mean, var, w) in enumerate(layer_params):
        c_l = c0 + l * g
        inv_std = 1.0 / jnp.sqrt(var.astype(jnp.float32) + _BN_EPS)
        scale = (gamma * inv_std).astype(jnp.float32).reshape(c_l, 1)
        shift = (beta - mean * gamma * inv_std).astype(jnp.float32).reshape(c_l, 1)
        # Stack the 9 tap filters on the output-row axis: row = (ky*3+kx)*g + g_out.
        wf = jnp.transpose(w, (2, 3, 0, 1)).reshape(9 * g, c_l).astype(jnp.bfloat16)
        inputs += [wf, scale, shift]
        in_specs += [
            pl.BlockSpec((9 * g, c_l), lambda i: (0, 0)),
            pl.BlockSpec((c_l, 1), lambda i: (0, 0)),
            pl.BlockSpec((c_l, 1), lambda i: (0, 0)),
        ]
        flops += 2 * b * (9 * g) * c_l * N

    kernel = _make_dense_block_kernel(c0, g, L, H, W, roll_like_jnp)
    out_flat = pl.pallas_call(
        kernel,
        out_shape=jax.ShapeDtypeStruct((b, cf, N), jnp.float32),
        grid=(b,),
        in_specs=in_specs,
        out_specs=pl.BlockSpec((1, cf, N), lambda i: (i, 0, 0)),
        compiler_params=pltpu.CompilerParams(
            dimension_semantics=("parallel",)),
        cost_estimate=pl.CostEstimate(
            flops=int(flops),
            transcendentals=0,
            bytes_accessed=int(4 * b * (c0 + cf) * N)),
    )(*inputs)

    return out_flat.reshape(b, cf, H, W)


# ----------------------------------------------------------------------------
# Pure-JAX reference (eval-mode BatchNorm), for verification.
# ----------------------------------------------------------------------------
def dense_block_reference(x, layer_params):
    for gamma, beta, mean, var, w in layer_params:
        z = (x - mean[None, :, None, None]) / jnp.sqrt(
            var[None, :, None, None] + _BN_EPS)
        z = z * gamma[None, :, None, None] + beta[None, :, None, None]
        z = jnp.maximum(z, 0.0)
        out = lax.conv_general_dilated(
            z, w, window_strides=(1, 1), padding="SAME",
            dimension_numbers=("NCHW", "OIHW", "NCHW"))
        x = jnp.concatenate([out, x], axis=1)
    return x


if __name__ == "__main__":
    key = jax.random.PRNGKey(0)

    # Small shapes, kept (8,128)-friendly: channel counts are multiples of 8 and
    # H*W = 256 is a multiple of 128 (lane-dense stores, aligned sublane slices).
    B, C0, G, L, H, W = 2, 8, 8, 3, 16, 16

    key, kx = jax.random.split(key)
    x = jax.random.normal(kx, (B, C0, H, W), dtype=jnp.float32)

    layer_params = []
    c = C0
    for _ in range(L):
        key, k1, k2, k3, k4, k5 = jax.random.split(key, 6)
        gamma = 0.5 + jax.random.uniform(k1, (c,), dtype=jnp.float32)
        beta = 0.1 * jax.random.normal(k2, (c,), dtype=jnp.float32)
        mean = 0.1 * jax.random.normal(k3, (c,), dtype=jnp.float32)
        var = 0.5 + jax.random.uniform(k4, (c,), dtype=jnp.float32)
        w = (1.0 / (9.0 * c) ** 0.5) * jax.random.normal(
            k5, (G, c, 3, 3), dtype=jnp.float32)
        layer_params.append((gamma, beta, mean, var, w))
        c += G

    roll_like_jnp = probe_roll_like_jnp()   # eager, one tiny kernel

    fwd = jax.jit(dense_block_forward,
                  static_argnames=("growth_rate", "roll_like_jnp"))
    out = fwd(x, tuple(layer_params), growth_rate=G, roll_like_jnp=roll_like_jnp)
    out = jax.block_until_ready(out)

    ref = dense_block_reference(x, layer_params)
    assert out.shape == ref.shape == (B, C0 + L * G, H, W)
    max_err = float(jnp.max(jnp.abs(out - ref)))
    # Tolerance sized for bf16 MXU operands (f32 accumulation) vs f32 reference;
    # any structural bug (wrong tap/mask/weight order) gives O(1) errors.
    assert bool(jnp.allclose(out, ref, atol=3e-2, rtol=3e-2)), max_err
    print("KERNEL_OK")
</pallas_src>

<mosaic_0001>
module attributes {stable_mosaic.version = 11 : i64} {
  func.func @_roll_probe_kernel(%arg0: memref<8x128xf32, #tpu.memory_space<vmem>>, %arg1: memref<8x128xf32, #tpu.memory_space<vmem>>) attributes {dimension_semantics = [], scalar_prefetch = 0 : i64, scratch_operands = 0 : i64, tpu.core_type = #tpu.core_type<tc>} {
    %c0 = arith.constant 0 : index
    %c0_0 = arith.constant 0 : index
    %0 = vector.load %arg0[%c0, %c0_0] : memref<8x128xf32, #tpu.memory_space<vmem>>, vector<8x128xf32>
    %c1_i32 = arith.constant 1 : i32
    %1 = tpu.dynamic_rotate %0 by %c1_i32 dim 1 : vector<8x128xf32>, i32 -> vector<8x128xf32>
    %c0_1 = arith.constant 0 : index
    %c0_2 = arith.constant 0 : index
    %2 = vector.load %arg1[%c0_1, %c0_2] : memref<8x128xf32, #tpu.memory_space<vmem>>, vector<8x128xf32>
    tpu.vector_store %arg1[%c0_1, %c0_2], %1 {strides = array<i32>} : memref<8x128xf32, #tpu.memory_space<vmem>>, vector<8x128xf32>,
    return
  }
}

</mosaic_0001>

<llo_original>
// kernel: tpu_custom_call.1
$region0: #{tpu_custom_call.1}
  #allocation0 [shape = 'u32[]', space=smem, size = 0x4, offset = 0x4, fixed_abs, tag = 'smem constant byte address 0x4 - core index']
  #allocation1 [shape = 'u32[144,128]{1,0:T(1,128)}', space=vmem, size = 0x12000, scoped, tag = 'internal scratch']
  %s0 = inlined_call_operand.hbm [shape: f32[8,128], index: 0, kind: input, shape index: {}]
  %s1 = inlined_call_operand.hbm [shape: f32[8,128], index: 1, kind: output, shape index: {}]
  %s2 = sld [smem:[#allocation0]]
  $region18: #{tpu_custom_call.1} parent=0
    _
  %s4 = ssub.s32 1, %s2
  %s5 = scalar_select 0, %s4, %s2
  $region1: #{tpu_custom_call.1} parent=0
    #allocation2 [shape = 'u8[4096]{0}', space=vmem, size = 0x1000, scoped, tag = 'input window, operand 0, single buffered']
    #allocation3 [shape = 's32[1]{0}', space=sflag, size = 0x4, scoped, tag = 'scoped memory for tpu_custom_call.1']
    #allocation4 [shape = 's32[1]{0}', space=sflag, size = 0x4, scoped, tag = 'scoped memory for tpu_custom_call.1']
    #allocation5 [shape = 'u8[4096]{0}', space=vmem, size = 0x1000, scoped, tag = 'output window, operand 0, single buffered']
    %6 = vsyncpa [#allocation3], 0
    %7 = vsyncpa [#allocation4], 0
    // Predicated region
    $region2: #{tpu_custom_call.1} parent=1 // pred_check
      _
    $region3: #{tpu_custom_call.1} parent=1 // pred_check_branch
      %9 = sbr.rel (0) target = $region5
    $region4: #{tpu_custom_call.1} parent=1 // pred_region
      %s11 = ssub.s32 128, 128
      %12 = vsyncadd [#allocation3], %s11
      %s14 = sshll.u32 [#allocation2], 4
      %s15 = int_to_ptr.vmem [resolvable:$true] %s14
      %17 = dma.hbm_to_vmem [thread:$0]  %s0, 128, %s15, [#allocation3]
    $region5: #{tpu_custom_call.1} parent=1 // pred_fallthru
      _
    // Predicated region
    $region6: #{tpu_custom_call.1} parent=1 // pred_check
      _
    $region7: #{tpu_custom_call.1} parent=1 // pred_check_branch
      %19 = sbr.rel (0) target = $region9
    $region8: #{tpu_custom_call.1} parent=1 // pred_region
      %20 = dma.done [#allocation3], 128
    $region9: #{tpu_custom_call.1} parent=1 // pred_fallthru
      _
    %v21 = vld [vmem:[#allocation2] sm:$0xff]
    %22 = vrot.lane.b32.xlu0 %v21, 1
    %v23 = vpop.permute.xlu0 %22
    %24 = vst [vmem:[#allocation5] sm:$0xff] %v23
    // Predicated region
    $region10: #{tpu_custom_call.1} parent=1 // pred_check
      _
    $region11: #{tpu_custom_call.1} parent=1 // pred_check_branch
      %26 = sbr.rel (0) target = $region13
    $region12: #{tpu_custom_call.1} parent=1 // pred_region
      %s28 = ssub.s32 128, 128
      %29 = vsyncadd [#allocation4], %s28
      %s31 = sshll.u32 [#allocation5], 4
      %s32 = int_to_ptr.vmem [resolvable:$true] %s31
      %34 = dma.vmem_to_hbm [thread:$0]  %s32, 128, %s1, [#allocation4]
    $region13: #{tpu_custom_call.1} parent=1 // pred_fallthru
      _
    // Predicated region
    $region14: #{tpu_custom_call.1} parent=1 // pred_check
      _
    $region15: #{tpu_custom_call.1} parent=1 // pred_check_branch
      %36 = sbr.rel (0) target = $region17
    $region16: #{tpu_custom_call.1} parent=1 // pred_region
      %37 = dma.done [#allocation4], 128
    $region17: #{tpu_custom_call.1} parent=1 // pred_fallthru
      _
    %38 = vsyncpa [#allocation3], 1
    %39 = vsyncpa [#allocation4], 1

</llo_original>
